<compile_context>
chip_gen: v7x
topology: tpu7x:2x2x1
jax: 0.10.0
libtpu: 0.0.40
codegen_flags: <defaults>
</compile_context>

<pallas_src>
import functools

import numpy as np
import jax
import jax.numpy as jnp
from jax.experimental import pallas as pl
from jax.experimental.pallas import tpu as pltpu

# ----------------------------- deterministic "parameters" -----------------------------
WIN = 11
SIGMA = 1.5
EDGE_WEIGHT = 0.07
COLOR_WEIGHT = 0.1
CR_WEIGHT = 0.5
C1 = 0.01 ** 2
C2 = 0.03 ** 2
EPS = 1e-7
_PAD = WIN // 2


def _gaussian_1d(size, sigma):
    xs = np.arange(size, dtype=np.float64) - size // 2
    g = np.exp(-(xs ** 2) / (2.0 * sigma ** 2))
    return (g / g.sum()).astype(np.float32)


def _gauss_band(n):
    """(n, n) symmetric band matrix: GH @ X (or X @ GW) == zero-padded 'same' 1-D gaussian conv."""
    g = _gaussian_1d(WIN, SIGMA)
    m = np.zeros((n, n), np.float32)
    for i in range(n):
        for k in range(WIN):
            j = i - _PAD + k
            if 0 <= j < n:
                m[i, j] = g[k]
    return m


def _sobel_bands(h, w):
    """Band matrices so that  SV @ X @ DW == valid Sobel-X  and  DV @ X @ SW == valid Sobel-Y."""
    sv = np.zeros((h - 2, h), np.float32)   # [1,2,1] smoothing along rows
    dv = np.zeros((h - 2, h), np.float32)   # [-1,0,1] difference along rows
    for i in range(h - 2):
        sv[i, i], sv[i, i + 1], sv[i, i + 2] = 1.0, 2.0, 1.0
        dv[i, i], dv[i, i + 2] = -1.0, 1.0
    sw = np.zeros((w, w - 2), np.float32)   # [1,2,1] smoothing along cols
    dw = np.zeros((w, w - 2), np.float32)   # [-1,0,1] difference along cols
    for j in range(w - 2):
        sw[j, j], sw[j + 1, j], sw[j + 2, j] = 1.0, 2.0, 1.0
        dw[j, j], dw[j + 2, j] = -1.0, 1.0
    return sv, dv, sw, dw


def _blkdiag(m, k):
    """Block-diagonal matrix with k copies of m on the diagonal."""
    r, c = m.shape
    out = np.zeros((r * k, c * k), m.dtype)
    for i in range(k):
        out[i * r:(i + 1) * r, i * c:(i + 1) * c] = m
    return out


# ----------------------------------- Pallas kernel ------------------------------------
def hr_loss_kernel(e_ref, r_ref, a_ref, gh5_ref, gwb_ref, sdv_ref, rb2_ref, ind_ref,
                   out_ref, *, H, W, TB, mm_dtype):
    f32 = jnp.float32
    e = e_ref[...]                      # (H, TB*W)  TB channel images lane-concatenated
    r = r_ref[...]
    a = a_ref[...]
    inv_hw = 1.0 / float(H * W)

    def ssum(x):                        # full-array sum -> (1, 1): lane reduce, sublane reduce
        return jnp.sum(jnp.sum(x, axis=1, keepdims=True), axis=0, keepdims=True)

    # ---- SSIM: all 5 gaussian blurs of all TB images in 2 fused MXU matmuls ----
    x5 = jnp.concatenate([e, r, e * e, r * r, e * r], axis=0).astype(mm_dtype)   # (5H, TB*W)
    t = jnp.dot(gh5_ref[...], x5, preferred_element_type=f32)                    # row blur
    y = jnp.dot(t.astype(mm_dtype), gwb_ref[...], preferred_element_type=f32)    # col blur
    mu1 = y[0 * H:1 * H, :]
    mu2 = y[1 * H:2 * H, :]
    b_ee = y[2 * H:3 * H, :]
    b_rr = y[3 * H:4 * H, :]
    b_er = y[4 * H:5 * H, :]
    mu1_sq = mu1 * mu1
    mu2_sq = mu2 * mu2
    mu1_mu2 = mu1 * mu2
    sigma1_sq = b_ee - mu1_sq
    sigma2_sq = b_rr - mu2_sq
    sigma12 = b_er - mu1_mu2
    num = (2.0 * mu1_mu2 + C1) * (2.0 * sigma12 + C2)
    den = (mu1_sq + mu2_sq + C1) * (sigma1_sq + sigma2_sq + C2)
    ssim_s = ssum(num * pl.reciprocal(den, approx=True))                         # EUP divide

    # ---- Contrastive regularization (pixel-space L1; pos=ref, neg=raw hazy input) ----
    # TODO(synk): original ContrastLoss uses frozen pretrained VGG19 features and may
    #             average per-sample ratios; replaced with the batch-aggregated
    #             pixel-space L1 contrast ratio (no checkpoint loading allowed).
    d = e - r
    dpos_s = ssum(jnp.abs(d))
    dneg_s = ssum(jnp.abs(e - a))

    # ---- Edge-aware loss: Sobel is linear -> apply to (enc - ref); 2 fused matmuls ----
    d_mm = d.astype(mm_dtype)
    l = jnp.dot(sdv_ref[...], d_mm, preferred_element_type=f32)       # (2(H-2), TB*W)
    g = jnp.dot(l.astype(mm_dtype), rb2_ref[...], preferred_element_type=f32)  # (2(H-2), 2*TB*(W-2))
    absg = jnp.abs(g)
    rmask = jax.lax.broadcasted_iota(jnp.int32, g.shape, 0) < (H - 2)           # SV rows
    cmask = jax.lax.broadcasted_iota(jnp.int32, g.shape, 1) < (TB * (W - 2))    # DW cols
    egx_s = ssum(jnp.where(rmask & cmask, absg, 0.0))                 # SV @ d @ DW blocks
    egy_s = ssum(jnp.where((~rmask) & (~cmask), absg, 0.0))           # DV @ d @ SW blocks

    # ---- Color-correction: per-image sums of (e - r) via 0/1 indicator matmul ----
    per_img = jnp.sum(jnp.dot(d_mm, ind_ref[...], preferred_element_type=f32),
                      axis=0, keepdims=True)                          # (1, TB)
    col_s = jnp.sum(per_img * per_img, axis=1, keepdims=True) * (inv_hw * inv_hw)

    # ---- pack the six (1,1) partial sums into one (1, 8) row, accumulate on-chip ----
    lane = jax.lax.broadcasted_iota(jnp.int32, (1, 8), 1)
    row = jnp.zeros((1, 8), f32)
    for idx, v in enumerate((ssim_s, dpos_s, dneg_s, egx_s, egy_s, col_s)):
        row = row + jnp.where(lane == idx, v, 0.0)

    @pl.when(pl.program_id(0) == 0)
    def _():
        out_ref[...] = jnp.zeros_like(out_ref)
    out_ref[...] += row


# -------------------------------------- wrapper ----------------------------------------
def hr_loss(raw, enc, ref, use_color_correction_loss=True, images_per_step=None,
            matmul_dtype=jnp.bfloat16):
    """Equivalent of HRLossV1_0.forward(raw, enc, ref, opt). Inputs are NCHW float32."""
    N, C, H, W = enc.shape
    B = N * C
    TB = B if images_per_step is None else images_per_step
    assert B % TB == 0, "images_per_step must divide N*C"
    assert TB == B or (TB * W) % 128 == 0, "when tiling over images, keep TB*W a multiple of 128"
    LW = TB * W
    nb = B // TB

    # Lane-concatenate channel images: (B, H, W) -> (H, B*W), so all elementwise work
    # and the matmul lane (N) dimensions are dense.  Cheap layout plumbing in XLA.
    def to_lane(x):
        return x.reshape(B, H, W).transpose(1, 0, 2).reshape(H, B * W).astype(jnp.float32)

    e_l, r_l, a_l = to_lane(enc), to_lane(ref), to_lane(raw)

    # Band-matrix constants (bf16 once on the host; f32 accumulation inside the kernel).
    gh5 = jnp.asarray(_blkdiag(_gauss_band(H), 5), matmul_dtype)              # (5H, 5H)
    gwb = jnp.asarray(_blkdiag(_gauss_band(W), TB), matmul_dtype)             # (TB*W, TB*W)
    sv, dv, sw, dw = _sobel_bands(H, W)
    sdv = jnp.asarray(np.vstack([sv, dv]), matmul_dtype)                      # (2(H-2), H)
    rb2 = jnp.asarray(np.hstack([_blkdiag(dw, TB), _blkdiag(sw, TB)]), matmul_dtype)  # (TB*W, 2TB(W-2))
    ind_np = np.zeros((LW, TB), np.float32)
    ind_np[np.arange(LW), np.arange(LW) // W] = 1.0
    ind = jnp.asarray(ind_np, matmul_dtype)                                   # (TB*W, TB)

    img_spec = pl.BlockSpec((H, LW), lambda b: (0, b))

    def cspec(shape):
        return pl.BlockSpec(shape, lambda b: (0, 0))

    flops = nb * 2 * ((5 * H) * (5 * H) * LW + (5 * H) * LW * LW
                      + (2 * (H - 2)) * H * LW
                      + (2 * (H - 2)) * LW * (2 * TB * (W - 2))
                      + H * LW * TB)
    const_bytes = sum(int(x.size) * x.dtype.itemsize for x in (gh5, gwb, sdv, rb2, ind))
    cost = pl.CostEstimate(flops=int(flops),
                           transcendentals=int(nb * H * LW),
                           bytes_accessed=int(nb * 3 * H * LW * 4 + const_bytes + 32))

    out = pl.pallas_call(
        functools.partial(hr_loss_kernel, H=H, W=W, TB=TB, mm_dtype=matmul_dtype),
        out_shape=jax.ShapeDtypeStruct((1, 8), jnp.float32),
        grid=(nb,),
        in_specs=[img_spec, img_spec, img_spec,
                  cspec(gh5.shape), cspec(gwb.shape), cspec(sdv.shape),
                  cspec(rb2.shape), cspec(ind.shape)],
        out_specs=pl.BlockSpec((1, 8), lambda b: (0, 0)),
        compiler_params=pltpu.CompilerParams(dimension_semantics=("arbitrary",)),
        cost_estimate=cost,
    )(e_l, r_l, a_l, gh5, gwb, sdv, rb2, ind)

    sums = out[0]                                  # [ssim, dpos, dneg, egx, egy, col, 0, 0]
    n_pix = float(B * H * W)
    n_edge = float(B * (H - 2) * (W - 2))

    l_ssim = 1.0 - sums[0] / n_pix
    d_pos = sums[1] / n_pix
    d_neg = sums[2] / n_pix
    l_cr = CR_WEIGHT * d_pos / (d_neg + EPS)
    l_edge = EDGE_WEIGHT * 0.5 * (sums[3] + sums[4]) / n_edge
    l_color = COLOR_WEIGHT * sums[5] / B

    losses = {'hr_ssim': l_ssim, 'hr_cr': l_cr, 'hr_edge': l_edge, 'hr_color': l_color}
    total = l_ssim + l_cr + l_edge
    if use_color_correction_loss:
        total = total + l_color
    return total, losses


# --------------------------------------- main ------------------------------------------
if __name__ == "__main__":
    key = jax.random.PRNGKey(0)
    k1, k2, k3 = jax.random.split(key, 3)
    N, C, H, W = 2, 3, 16, 16                      # small NCHW images
    raw = jax.random.uniform(k1, (N, C, H, W), jnp.float32)          # hazy input
    ref = jax.random.uniform(k2, (N, C, H, W), jnp.float32)          # ground truth
    enc = jnp.clip(ref + 0.1 * jax.random.normal(k3, (N, C, H, W), jnp.float32),
                   0.0, 1.0).astype(jnp.float32)                     # network output

    total, losses = hr_loss(raw, enc, ref, use_color_correction_loss=True)
    jax.block_until_ready(total)
    print("KERNEL_OK")
</pallas_src>

<mosaic_0001>
module attributes {stable_mosaic.version = 11 : i64} {
  func.func @hr_loss_kernel(%arg0: i32, %arg1: memref<16x96xf32, #tpu.memory_space<vmem>>, %arg2: memref<16x96xf32, #tpu.memory_space<vmem>>, %arg3: memref<16x96xf32, #tpu.memory_space<vmem>>, %arg4: memref<80x80xbf16, #tpu.memory_space<vmem>>, %arg5: memref<96x96xbf16, #tpu.memory_space<vmem>>, %arg6: memref<28x16xbf16, #tpu.memory_space<vmem>>, %arg7: memref<96x168xbf16, #tpu.memory_space<vmem>>, %arg8: memref<96x6xbf16, #tpu.memory_space<vmem>>, %arg9: memref<1x8xf32, #tpu.memory_space<vmem>>) attributes {dimension_semantics = [#tpu.dimension_semantics<arbitrary>], iteration_bounds = array<i64: 1>, scalar_prefetch = 0 : i64, scratch_operands = 0 : i64, tpu.core_type = #tpu.core_type<tc>, window_params = [{transform_indices = @transform_0, window_bounds = array<i64: 16, 96>}, {transform_indices = @transform_1, window_bounds = array<i64: 16, 96>}, {transform_indices = @transform_2, window_bounds = array<i64: 16, 96>}, {pipeline_mode = #tpu.pipeline_mode<synchronous>, transform_indices = @transform_3, window_bounds = array<i64: 80, 80>}, {pipeline_mode = #tpu.pipeline_mode<synchronous>, transform_indices = @transform_4, window_bounds = array<i64: 96, 96>}, {pipeline_mode = #tpu.pipeline_mode<synchronous>, transform_indices = @transform_5, window_bounds = array<i64: 28, 16>}, {pipeline_mode = #tpu.pipeline_mode<synchronous>, transform_indices = @transform_6, window_bounds = array<i64: 96, 168>}, {pipeline_mode = #tpu.pipeline_mode<synchronous>, transform_indices = @transform_7, window_bounds = array<i64: 96, 6>}, {pipeline_mode = #tpu.pipeline_mode<synchronous>, transform_indices = @transform_8, window_bounds = array<i64: 1, 8>}]} {
    %c0 = arith.constant 0 : index
    %c0_0 = arith.constant 0 : index
    %0 = vector.load %arg1[%c0, %c0_0] : memref<16x96xf32, #tpu.memory_space<vmem>>, vector<16x96xf32>
    %c0_1 = arith.constant 0 : index
    %c0_2 = arith.constant 0 : index
    %1 = vector.load %arg2[%c0_1, %c0_2] : memref<16x96xf32, #tpu.memory_space<vmem>>, vector<16x96xf32>
    %c0_3 = arith.constant 0 : index
    %c0_4 = arith.constant 0 : index
    %2 = vector.load %arg3[%c0_3, %c0_4] : memref<16x96xf32, #tpu.memory_space<vmem>>, vector<16x96xf32>
    %3 = arith.mulf %0, %0 : vector<16x96xf32>
    %4 = arith.mulf %1, %1 : vector<16x96xf32>
    %5 = arith.mulf %0, %1 : vector<16x96xf32>
    %6 = tpu.concatenate %0, %1, %3, %4, %5 in 0 : vector<16x96xf32>, vector<16x96xf32>, vector<16x96xf32>, vector<16x96xf32>, vector<16x96xf32> -> vector<80x96xf32>
    %7 = arith.truncf %6 : vector<80x96xf32> to vector<80x96xbf16>
    %c0_5 = arith.constant 0 : index
    %c0_6 = arith.constant 0 : index
    %8 = vector.load %arg4[%c0_5, %c0_6] : memref<80x80xbf16, #tpu.memory_space<vmem>>, vector<80x80xbf16>
    %cst = arith.constant dense<0.000000e+00> : vector<80x96xf32>
    %9 = tpu.matmul %8, %7, %cst {dimension_numbers = #tpu.dot_dimension_numbers<[1], [0], [0], [1], [0, 0, 1, 1], [], []>} : vector<80x80xbf16>, vector<80x96xbf16>, vector<80x96xf32> -> vector<80x96xf32>
    %10 = arith.truncf %9 : vector<80x96xf32> to vector<80x96xbf16>
    %c0_7 = arith.constant 0 : index
    %c0_8 = arith.constant 0 : index
    %11 = vector.load %arg5[%c0_7, %c0_8] : memref<96x96xbf16, #tpu.memory_space<vmem>>, vector<96x96xbf16>
    %cst_9 = arith.constant dense<0.000000e+00> : vector<80x96xf32>
    %12 = tpu.matmul %10, %11, %cst_9 {dimension_numbers = #tpu.dot_dimension_numbers<[1], [0], [0], [1], [0, 0, 1, 1], [], []>} : vector<80x96xbf16>, vector<96x96xbf16>, vector<80x96xf32> -> vector<80x96xf32>
    %13 = vector.extract_strided_slice %12 {offsets = [0, 0], sizes = [16, 96], strides = [1, 1]} : vector<80x96xf32> to vector<16x96xf32>
    %14 = vector.extract_strided_slice %12 {offsets = [16, 0], sizes = [16, 96], strides = [1, 1]} : vector<80x96xf32> to vector<16x96xf32>
    %15 = vector.extract_strided_slice %12 {offsets = [32, 0], sizes = [16, 96], strides = [1, 1]} : vector<80x96xf32> to vector<16x96xf32>
    %16 = vector.extract_strided_slice %12 {offsets = [48, 0], sizes = [16, 96], strides = [1, 1]} : vector<80x96xf32> to vector<16x96xf32>
    %17 = vector.extract_strided_slice %12 {offsets = [64, 0], sizes = [16, 96], strides = [1, 1]} : vector<80x96xf32> to vector<16x96xf32>
    %18 = arith.mulf %13, %13 : vector<16x96xf32>
    %19 = arith.mulf %14, %14 : vector<16x96xf32>
    %20 = arith.mulf %13, %14 : vector<16x96xf32>
    %21 = arith.subf %15, %18 : vector<16x96xf32>
    %22 = arith.subf %16, %19 : vector<16x96xf32>
    %23 = arith.subf %17, %20 : vector<16x96xf32>
    %cst_10 = arith.constant 2.000000e+00 : f32
    %24 = vector.broadcast %cst_10 : f32 to vector<16x96xf32>
    %25 = arith.mulf %24, %20 : vector<16x96xf32>
    %cst_11 = arith.constant 9.99999974E-5 : f32
    %26 = vector.broadcast %cst_11 : f32 to vector<16x96xf32>
    %27 = arith.addf %25, %26 : vector<16x96xf32>
    %cst_12 = arith.constant 2.000000e+00 : f32
    %28 = vector.broadcast %cst_12 : f32 to vector<16x96xf32>
    %29 = arith.mulf %28, %23 : vector<16x96xf32>
    %cst_13 = arith.constant 8.99999984E-4 : f32
    %30 = vector.broadcast %cst_13 : f32 to vector<16x96xf32>
    %31 = arith.addf %29, %30 : vector<16x96xf32>
    %32 = arith.mulf %27, %31 : vector<16x96xf32>
    %33 = arith.addf %18, %19 : vector<16x96xf32>
    %cst_14 = arith.constant 9.99999974E-5 : f32
    %34 = vector.broadcast %cst_14 : f32 to vector<16x96xf32>
    %35 = arith.addf %33, %34 : vector<16x96xf32>
    %36 = arith.addf %21, %22 : vector<16x96xf32>
    %cst_15 = arith.constant 8.99999984E-4 : f32
    %37 = vector.broadcast %cst_15 : f32 to vector<16x96xf32>
    %38 = arith.addf %36, %37 : vector<16x96xf32>
    %39 = arith.mulf %35, %38 : vector<16x96xf32>
    %40 = tpu.reciprocal %39 {approx = true} : vector<16x96xf32> -> vector<16x96xf32>
    %41 = arith.mulf %32, %40 : vector<16x96xf32>
    %cst_16 = arith.constant dense<0.000000e+00> : vector<16xf32>
    %42 = vector.multi_reduction <add>, %41, %cst_16 [1] : vector<16x96xf32> to vector<16xf32>
    %43 = vector.shape_cast %42 : vector<16xf32> to vector<16x1xf32>
    %cst_17 = arith.constant dense<0.000000e+00> : vector<1xf32>
    %44 = vector.multi_reduction <add>, %43, %cst_17 [0] : vector<16x1xf32> to vector<1xf32>
    %45 = vector.shape_cast %44 : vector<1xf32> to vector<1x1xf32>
    %46 = arith.subf %0, %1 : vector<16x96xf32>
    %47 = math.absf %46 : vector<16x96xf32>
    %cst_18 = arith.constant dense<0.000000e+00> : vector<16xf32>
    %48 = vector.multi_reduction <add>, %47, %cst_18 [1] : vector<16x96xf32> to vector<16xf32>
    %49 = vector.shape_cast %48 : vector<16xf32> to vector<16x1xf32>
    %cst_19 = arith.constant dense<0.000000e+00> : vector<1xf32>
    %50 = vector.multi_reduction <add>, %49, %cst_19 [0] : vector<16x1xf32> to vector<1xf32>
    %51 = vector.shape_cast %50 : vector<1xf32> to vector<1x1xf32>
    %52 = arith.subf %0, %2 : vector<16x96xf32>
    %53 = math.absf %52 : vector<16x96xf32>
    %cst_20 = arith.constant dense<0.000000e+00> : vector<16xf32>
    %54 = vector.multi_reduction <add>, %53, %cst_20 [1] : vector<16x96xf32> to vector<16xf32>
    %55 = vector.shape_cast %54 : vector<16xf32> to vector<16x1xf32>
    %cst_21 = arith.constant dense<0.000000e+00> : vector<1xf32>
    %56 = vector.multi_reduction <add>, %55, %cst_21 [0] : vector<16x1xf32> to vector<1xf32>
    %57 = vector.shape_cast %56 : vector<1xf32> to vector<1x1xf32>
    %58 = arith.truncf %46 : vector<16x96xf32> to vector<16x96xbf16>
    %c0_22 = arith.constant 0 : index
    %c0_23 = arith.constant 0 : index
    %59 = vector.load %arg6[%c0_22, %c0_23] : memref<28x16xbf16, #tpu.memory_space<vmem>>, vector<28x16xbf16>
    %cst_24 = arith.constant dense<0.000000e+00> : vector<28x96xf32>
    %60 = tpu.matmul %59, %58, %cst_24 {dimension_numbers = #tpu.dot_dimension_numbers<[1], [0], [0], [1], [0, 0, 1, 1], [], []>} : vector<28x16xbf16>, vector<16x96xbf16>, vector<28x96xf32> -> vector<28x96xf32>
    %61 = arith.truncf %60 : vector<28x96xf32> to vector<28x96xbf16>
    %c0_25 = arith.constant 0 : index
    %c0_26 = arith.constant 0 : index
    %62 = vector.load %arg7[%c0_25, %c0_26] : memref<96x168xbf16, #tpu.memory_space<vmem>>, vector<96x168xbf16>
    %cst_27 = arith.constant dense<0.000000e+00> : vector<28x168xf32>
    %63 = tpu.matmul %61, %62, %cst_27 {dimension_numbers = #tpu.dot_dimension_numbers<[1], [0], [0], [1], [0, 0, 1, 1], [], []>} : vector<28x96xbf16>, vector<96x168xbf16>, vector<28x168xf32> -> vector<28x168xf32>
    %64 = math.absf %63 : vector<28x168xf32>
    %65 = tpu.iota {dimensions = array<i32: 0>} : vector<28x168xi32>
    %c14_i32 = arith.constant 14 : i32
    %66 = vector.broadcast %c14_i32 : i32 to vector<28x168xi32>
    %67 = arith.cmpi slt, %65, %66 : vector<28x168xi32>
    %68 = tpu.iota {dimensions = array<i32: 1>} : vector<28x168xi32>
    %c84_i32 = arith.constant 84 : i32
    %69 = vector.broadcast %c84_i32 : i32 to vector<28x168xi32>
    %70 = arith.cmpi slt, %68, %69 : vector<28x168xi32>
    %71 = arith.andi %67, %70 : vector<28x168xi1>
    %cst_28 = arith.constant 0.000000e+00 : f32
    %72 = vector.broadcast %cst_28 : f32 to vector<28x168xf32>
    %73 = arith.select %71, %64, %72 : vector<28x168xi1>, vector<28x168xf32>
    %cst_29 = arith.constant dense<0.000000e+00> : vector<28xf32>
    %74 = vector.multi_reduction <add>, %73, %cst_29 [1] : vector<28x168xf32> to vector<28xf32>
    %75 = vector.shape_cast %74 : vector<28xf32> to vector<28x1xf32>
    %cst_30 = arith.constant dense<0.000000e+00> : vector<1xf32>
    %76 = vector.multi_reduction <add>, %75, %cst_30 [0] : vector<28x1xf32> to vector<1xf32>
    %77 = vector.shape_cast %76 : vector<1xf32> to vector<1x1xf32>
    %cst_31 = arith.constant dense<true> : vector<28x168xi1>
    %78 = arith.xori %67, %cst_31 : vector<28x168xi1>
    %cst_32 = arith.constant dense<true> : vector<28x168xi1>
    %79 = arith.xori %70, %cst_32 : vector<28x168xi1>
    %80 = arith.andi %78, %79 : vector<28x168xi1>
    %cst_33 = arith.constant 0.000000e+00 : f32
    %81 = vector.broadcast %cst_33 : f32 to vector<28x168xf32>
    %82 = arith.select %80, %64, %81 : vector<28x168xi1>, vector<28x168xf32>
    %cst_34 = arith.constant dense<0.000000e+00> : vector<28xf32>
    %83 = vector.multi_reduction <add>, %82, %cst_34 [1] : vector<28x168xf32> to vector<28xf32>
    %84 = vector.shape_cast %83 : vector<28xf32> to vector<28x1xf32>
    %cst_35 = arith.constant dense<0.000000e+00> : vector<1xf32>
    %85 = vector.multi_reduction <add>, %84, %cst_35 [0] : vector<28x1xf32> to vector<1xf32>
    %86 = vector.shape_cast %85 : vector<1xf32> to vector<1x1xf32>
    %c0_36 = arith.constant 0 : index
    %c0_37 = arith.constant 0 : index
    %87 = vector.load %arg8[%c0_36, %c0_37] : memref<96x6xbf16, #tpu.memory_space<vmem>>, vector<96x6xbf16>
    %cst_38 = arith.constant dense<0.000000e+00> : vector<16x6xf32>
    %88 = tpu.matmul %58, %87, %cst_38 {dimension_numbers = #tpu.dot_dimension_numbers<[1], [0], [0], [1], [0, 0, 1, 1], [], []>} : vector<16x96xbf16>, vector<96x6xbf16>, vector<16x6xf32> -> vector<16x6xf32>
    %cst_39 = arith.constant dense<0.000000e+00> : vector<6xf32>
    %89 = vector.multi_reduction <add>, %88, %cst_39 [0] : vector<16x6xf32> to vector<6xf32>
    %90 = vector.shape_cast %89 : vector<6xf32> to vector<1x6xf32>
    %91 = arith.mulf %90, %90 : vector<1x6xf32>
    %cst_40 = arith.constant dense<0.000000e+00> : vector<1xf32>
    %92 = vector.multi_reduction <add>, %91, %cst_40 [1] : vector<1x6xf32> to vector<1xf32>
    %93 = vector.shape_cast %92 : vector<1xf32> to vector<1x1xf32>
    %cst_41 = arith.constant 1.52587891E-5 : f32
    %94 = vector.broadcast %cst_41 : f32 to vector<1x1xf32>
    %95 = arith.mulf %93, %94 : vector<1x1xf32>
    %96 = tpu.iota {dimensions = array<i32: 1>} : vector<1x8xi32>
    %cst_42 = arith.constant 0.000000e+00 : f32
    %97 = vector.broadcast %cst_42 : f32 to vector<1x8xf32>
    %c0_i32 = arith.constant 0 : i32
    %98 = vector.broadcast %c0_i32 : i32 to vector<1x8xi32>
    %99 = arith.cmpi eq, %96, %98 : vector<1x8xi32>
    %cst_43 = arith.constant 0.000000e+00 : f32
    %100 = vector.shape_cast %45 : vector<1x1xf32> to vector<1x1xf32>
    %101 = vector.broadcast %100 : vector<1x1xf32> to vector<1x8xf32>
    %102 = vector.broadcast %cst_43 : f32 to vector<1x8xf32>
    %103 = arith.select %99, %101, %102 : vector<1x8xi1>, vector<1x8xf32>
    %104 = arith.addf %97, %103 : vector<1x8xf32>
    %c1_i32 = arith.constant 1 : i32
    %105 = vector.broadcast %c1_i32 : i32 to vector<1x8xi32>
    %106 = arith.cmpi eq, %96, %105 : vector<1x8xi32>
    %cst_44 = arith.constant 0.000000e+00 : f32
    %107 = vector.shape_cast %51 : vector<1x1xf32> to vector<1x1xf32>
    %108 = vector.broadcast %107 : vector<1x1xf32> to vector<1x8xf32>
    %109 = vector.broadcast %cst_44 : f32 to vector<1x8xf32>
    %110 = arith.select %106, %108, %109 : vector<1x8xi1>, vector<1x8xf32>
    %111 = arith.addf %104, %110 : vector<1x8xf32>
    %c2_i32 = arith.constant 2 : i32
    %112 = vector.broadcast %c2_i32 : i32 to vector<1x8xi32>
    %113 = arith.cmpi eq, %96, %112 : vector<1x8xi32>
    %cst_45 = arith.constant 0.000000e+00 : f32
    %114 = vector.shape_cast %57 : vector<1x1xf32> to vector<1x1xf32>
    %115 = vector.broadcast %114 : vector<1x1xf32> to vector<1x8xf32>
    %116 = vector.broadcast %cst_45 : f32 to vector<1x8xf32>
    %117 = arith.select %113, %115, %116 : vector<1x8xi1>, vector<1x8xf32>
    %118 = arith.addf %111, %117 : vector<1x8xf32>
    %c3_i32 = arith.constant 3 : i32
    %119 = vector.broadcast %c3_i32 : i32 to vector<1x8xi32>
    %120 = arith.cmpi eq, %96, %119 : vector<1x8xi32>
    %cst_46 = arith.constant 0.000000e+00 : f32
    %121 = vector.shape_cast %77 : vector<1x1xf32> to vector<1x1xf32>
    %122 = vector.broadcast %121 : vector<1x1xf32> to vector<1x8xf32>
    %123 = vector.broadcast %cst_46 : f32 to vector<1x8xf32>
    %124 = arith.select %120, %122, %123 : vector<1x8xi1>, vector<1x8xf32>
    %125 = arith.addf %118, %124 : vector<1x8xf32>
    %c4_i32 = arith.constant 4 : i32
    %126 = vector.broadcast %c4_i32 : i32 to vector<1x8xi32>
    %127 = arith.cmpi eq, %96, %126 : vector<1x8xi32>
    %cst_47 = arith.constant 0.000000e+00 : f32
    %128 = vector.shape_cast %86 : vector<1x1xf32> to vector<1x1xf32>
    %129 = vector.broadcast %128 : vector<1x1xf32> to vector<1x8xf32>
    %130 = vector.broadcast %cst_47 : f32 to vector<1x8xf32>
    %131 = arith.select %127, %129, %130 : vector<1x8xi1>, vector<1x8xf32>
    %132 = arith.addf %125, %131 : vector<1x8xf32>
    %c5_i32 = arith.constant 5 : i32
    %133 = vector.broadcast %c5_i32 : i32 to vector<1x8xi32>
    %134 = arith.cmpi eq, %96, %133 : vector<1x8xi32>
    %cst_48 = arith.constant 0.000000e+00 : f32
    %135 = vector.shape_cast %95 : vector<1x1xf32> to vector<1x1xf32>
    %136 = vector.broadcast %135 : vector<1x1xf32> to vector<1x8xf32>
    %137 = vector.broadcast %cst_48 : f32 to vector<1x8xf32>
    %138 = arith.select %134, %136, %137 : vector<1x8xi1>, vector<1x8xf32>
    %139 = arith.addf %132, %138 : vector<1x8xf32>
    %c0_i32_49 = arith.constant 0 : i32
    %140 = arith.cmpi eq, %arg0, %c0_i32_49 : i32
    %141 = arith.extui %140 : i1 to i32
    %c0_i32_50 = arith.constant 0 : i32
    %142 = arith.cmpi ne, %141, %c0_i32_50 : i32
    scf.if %142 {
      %cst_55 = arith.constant 0.000000e+00 : f32
      %146 = vector.broadcast %cst_55 : f32 to vector<1x8xf32>
      %c0_56 = arith.constant 0 : index
      %c0_57 = arith.constant 0 : index
      %147 = vector.load %arg9[%c0_56, %c0_57] : memref<1x8xf32, #tpu.memory_space<vmem>>, vector<1x8xf32>
      tpu.vector_store %arg9[%c0_56, %c0_57], %146 {strides = array<i32>} : memref<1x8xf32, #tpu.memory_space<vmem>>, vector<1x8xf32>,
    } else {
    }
    %c0_51 = arith.constant 0 : index
    %c0_52 = arith.constant 0 : index
    %143 = vector.load %arg9[%c0_51, %c0_52] : memref<1x8xf32, #tpu.memory_space<vmem>>, vector<1x8xf32>
    %144 = arith.addf %143, %139 : vector<1x8xf32>
    %c0_53 = arith.constant 0 : index
    %c0_54 = arith.constant 0 : index
    %145 = vector.load %arg9[%c0_53, %c0_54] : memref<1x8xf32, #tpu.memory_space<vmem>>, vector<1x8xf32>
    tpu.vector_store %arg9[%c0_53, %c0_54], %144 {strides = array<i32>} : memref<1x8xf32, #tpu.memory_space<vmem>>, vector<1x8xf32>,
    return
  }
  func.func @transform_0(%arg0: i32) -> (i32, i32) {
    %c0_i32 = arith.constant 0 : i32
    %c0_i32_0 = arith.constant 0 : i32
    return %c0_i32, %arg0 : i32, i32
  }
  func.func @transform_1(%arg0: i32) -> (i32, i32) {
    %c0_i32 = arith.constant 0 : i32
    %c0_i32_0 = arith.constant 0 : i32
    return %c0_i32, %arg0 : i32, i32
  }
  func.func @transform_2(%arg0: i32) -> (i32, i32) {
    %c0_i32 = arith.constant 0 : i32
    %c0_i32_0 = arith.constant 0 : i32
    return %c0_i32, %arg0 : i32, i32
  }
  func.func @transform_3(%arg0: i32) -> (i32, i32) {
    %c0_i32 = arith.constant 0 : i32
    %c0_i32_0 = arith.constant 0 : i32
    %c0_i32_1 = arith.constant 0 : i32
    return %c0_i32, %c0_i32_0 : i32, i32
  }
  func.func @transform_4(%arg0: i32) -> (i32, i32) {
    %c0_i32 = arith.constant 0 : i32
    %c0_i32_0 = arith.constant 0 : i32
    %c0_i32_1 = arith.constant 0 : i32
    return %c0_i32, %c0_i32_0 : i32, i32
  }
  func.func @transform_5(%arg0: i32) -> (i32, i32) {
    %c0_i32 = arith.constant 0 : i32
    %c0_i32_0 = arith.constant 0 : i32
    %c0_i32_1 = arith.constant 0 : i32
    return %c0_i32, %c0_i32_0 : i32, i32
  }
  func.func @transform_6(%arg0: i32) -> (i32, i32) {
    %c0_i32 = arith.constant 0 : i32
    %c0_i32_0 = arith.constant 0 : i32
    %c0_i32_1 = arith.constant 0 : i32
    return %c0_i32, %c0_i32_0 : i32, i32
  }
  func.func @transform_7(%arg0: i32) -> (i32, i32) {
    %c0_i32 = arith.constant 0 : i32
    %c0_i32_0 = arith.constant 0 : i32
    %c0_i32_1 = arith.constant 0 : i32
    return %c0_i32, %c0_i32_0 : i32, i32
  }
  func.func @transform_8(%arg0: i32) -> (i32, i32) {
    %c0_i32 = arith.constant 0 : i32
    %c0_i32_0 = arith.constant 0 : i32
    %c0_i32_1 = arith.constant 0 : i32
    return %c0_i32, %c0_i32_0 : i32, i32
  }
}

</mosaic_0001>

<llo_original>
// kernel: tpu_custom_call.1
$region0: #{tpu_custom_call.1}
  #allocation0 [shape = 'u32[]', space=smem, size = 0x4, offset = 0x4, fixed_abs, tag = 'smem constant byte address 0x4 - core index']
  #allocation1 [shape = 'u32[144,128]{1,0:T(1,128)}', space=vmem, size = 0x12000, scoped, tag = 'internal scratch']
  %s0 = inlined_call_operand.vmem [shape: f32[16,96], index: 0, kind: input, shape index: {}]
  %s1 = inlined_call_operand.vmem [shape: f32[16,96], index: 1, kind: input, shape index: {}]
  %s2 = inlined_call_operand.vmem [shape: f32[16,96], index: 2, kind: input, shape index: {}]
  %s3 = inlined_call_operand.vmem [shape: bf16[80,80], index: 3, kind: input, shape index: {}]
  %s4 = inlined_call_operand.vmem [shape: bf16[96,96], index: 4, kind: input, shape index: {}]
  %s5 = inlined_call_operand.vmem [shape: bf16[28,16], index: 5, kind: input, shape index: {}]
  %s6 = inlined_call_operand.vmem [shape: bf16[96,168], index: 6, kind: input, shape index: {}]
  %s7 = inlined_call_operand.vmem [shape: bf16[96,6], index: 7, kind: input, shape index: {}]
  %s8 = inlined_call_operand.hbm [shape: f32[1,8], index: 8, kind: output, shape index: {}]
  %s9 = sld [smem:[#allocation0]]
  $region46: #{tpu_custom_call.1} parent=0
    _
  %s11 = ssub.s32 1, %s9
  %s12 = scalar_select 0, %s11, %s9
  $region1: #{tpu_custom_call.1} parent=0
    #allocation2 [shape = 'u8[512]{0}', space=vmem, size = 0x400, scoped, tag = 'output window, operand 0, single buffered']
    #allocation3 [shape = 's32[1]{0}', space=sflag, size = 0x4, scoped, tag = 'scoped memory for tpu_custom_call.1']
    %13 = vsyncpa [#allocation3], 0
    // Predicated region
    $region2: #{tpu_custom_call.1} parent=1 // pred_check
      _
    $region3: #{tpu_custom_call.1} parent=1 // pred_check_branch
      %15 = sbr.rel (0) target = $region5
    $region4: #{tpu_custom_call.1} parent=1 // pred_region
      _
    $region5: #{tpu_custom_call.1} parent=1 // pred_fallthru
      _
    // Predicated region
    $region6: #{tpu_custom_call.1} parent=1 // pred_check
      _
    $region7: #{tpu_custom_call.1} parent=1 // pred_check_branch
      %17 = sbr.rel (0) target = $region9
    $region8: #{tpu_custom_call.1} parent=1 // pred_region
      _
    $region9: #{tpu_custom_call.1} parent=1 // pred_fallthru
      _
    // Predicated region
    $region10: #{tpu_custom_call.1} parent=1 // pred_check
      _
    $region11: #{tpu_custom_call.1} parent=1 // pred_check_branch
      %19 = sbr.rel (0) target = $region13
    $region12: #{tpu_custom_call.1} parent=1 // pred_region
      _
    $region13: #{tpu_custom_call.1} parent=1 // pred_fallthru
      _
    // Predicated region
    $region14: #{tpu_custom_call.1} parent=1 // pred_check
      _
    $region15: #{tpu_custom_call.1} parent=1 // pred_check_branch
      %21 = sbr.rel (0) target = $region17
    $region16: #{tpu_custom_call.1} parent=1 // pred_region
      _
    $region17: #{tpu_custom_call.1} parent=1 // pred_fallthru
      _
    // Predicated region
    $region18: #{tpu_custom_call.1} parent=1 // pred_check
      _
    $region19: #{tpu_custom_call.1} parent=1 // pred_check_branch
      %23 = sbr.rel (0) target = $region21
    $region20: #{tpu_custom_call.1} parent=1 // pred_region
      _
    $region21: #{tpu_custom_call.1} parent=1 // pred_fallthru
      _
    // Predicated region
    $region22: #{tpu_custom_call.1} parent=1 // pred_check
      _
    $region23: #{tpu_custom_call.1} parent=1 // pred_check_branch
      %25 = sbr.rel (0) target = $region25
    $region24: #{tpu_custom_call.1} parent=1 // pred_region
      _
    $region25: #{tpu_custom_call.1} parent=1 // pred_fallthru
      _
    // Predicated region
    $region26: #{tpu_custom_call.1} parent=1 // pred_check
      _
    $region27: #{tpu_custom_call.1} parent=1 // pred_check_branch
      %27 = sbr.rel (0) target = $region29
    $region28: #{tpu_custom_call.1} parent=1 // pred_region
      _
    $region29: #{tpu_custom_call.1} parent=1 // pred_fallthru
      _
    // Predicated region
    $region30: #{tpu_custom_call.1} parent=1 // pred_check
      _
    $region31: #{tpu_custom_call.1} parent=1 // pred_check_branch
      %29 = sbr.rel (0) target = $region33
    $region32: #{tpu_custom_call.1} parent=1 // pred_region
      _
    $region33: #{tpu_custom_call.1} parent=1 // pred_fallthru
      _
    %v31 = vld [vmem:[%s0] sm:$0xff]
    %v32 = vld [vmem:[%s0 + $0x8] sm:$0xff]
    %v33 = vld [vmem:[%s1] sm:$0xff]
    %v34 = vld [vmem:[%s1 + $0x8] sm:$0xff]
    %v35 = vld [vmem:[%s2] sm:$0xff]
    %v36 = vld [vmem:[%s2 + $0x8] sm:$0xff]
    %v37 = vmul.f32 %v31, %v31
    %v38 = vmul.f32 %v32, %v32
    %v39 = vmul.f32 %v33, %v33
    %v40 = vmul.f32 %v34, %v34
    %v41 = vmul.f32 %v31, %v33
    %v42 = vmul.f32 %v32, %v34
    %v43 = vpack.c.bf16 %v32, %v31
    %v44 = vpack.c.bf16 %v34, %v33
    %v45 = vpack.c.bf16 %v38, %v37
    %v46 = vpack.c.bf16 %v40, %v39
    %v47 = vpack.c.bf16 %v42, %v41
    %v48 = vld [vmem:[%s3] sm:$0xf]
    %v49 = vld [vmem:[%s3 + $0x4] sm:$0xf]
    %v50 = vld [vmem:[%s3 + $0x8] sm:$0xf]
    %v51 = vld [vmem:[%s3 + $0xc] sm:$0xf]
    %v52 = vld [vmem:[%s3 + $0x10] sm:$0xf]
    %v53 = vld [vmem:[%s3 + $0x14] sm:$0xf]
    %v54 = vld [vmem:[%s3 + $0x18] sm:$0xf]
    %v55 = vld [vmem:[%s3 + $0x1c] sm:$0xf]
    %v56 = vld [vmem:[%s3 + $0x20] sm:$0xf]
    %v57 = vld [vmem:[%s3 + $0x24] sm:$0xf]
    %v68 = vunpack.c.l.b16 %v48
    %v69 = vunpack.c.l.b16 %v49
    %v70 = vunpack.c.l.b16 %v50
    %v71 = vunpack.c.l.b16 %v51
    %v72 = vunpack.c.l.b16 %v52
    %v73 = vunpack.c.l.b16 %v53
    %v74 = vunpack.c.l.b16 %v54
    %v75 = vunpack.c.l.b16 %v55
    %v76 = vunpack.c.l.b16 %v56
    %v77 = vunpack.c.l.b16 %v57
    %v78 = vpack.c.b16 %v69, %v68
    %v79 = vpack.c.b16 %v71, %v70
    %v80 = vpack.c.b16 %v73, %v72
    %v81 = vpack.c.b16 %v75, %v74
    %v82 = vpack.c.b16 %v77, %v76
    %vm83 = vcmask 654336
    %v85 = vsel %vm83, %v78, 0
    %v88 = vsel %vm83, %v79, 0
    %v91 = vsel %vm83, %v80, 0
    %v94 = vsel %vm83, %v81, 0
    %v97 = vsel %vm83, %v82, 0
    %99 = vmatprep.subr.bf16.mxu0 0
    %100 = vmatpush1.bf16.msra.mxu0 %v43
    %101 = vmatprep.subr.bf16.mxu0 0
    %102 = vmatpush1.bf16.msra.mxu0 %v44
    %103 = vmatprep.subr.bf16.mxu0 0
    %104 = vmatpush1.bf16.msra.mxu0 %v45
    %105 = vmatprep.subr.bf16.mxu0 0
    %106 = vmatpush1.bf16.msra.mxu0 %v46
    %107 = vmatprep.subr.bf16.mxu0 0
    %108 = vmatpush1.bf16.msra.mxu0 %v47
    %109 = vmatprep.subr.bf16.mxu0 0
    %110 = vmatpush1.bf16.msra.mxu0 0
    %111 = vmatprep.subr.bf16.mxu0 0
    %112 = vmatpush1.bf16.msra.mxu0 0
    %113 = vmatprep.subr.bf16.mxu0 0
    %114 = vmatpush1.bf16.msra.mxu0 0
    %115 = vmatprep.subr.bf16.mxu0 0
    %116 = vmatpush1.bf16.msra.mxu0 0
    %117 = vmatprep.subr.bf16.mxu0 0
    %118 = vmatpush1.bf16.msra.mxu0 0
    %119 = vmatprep.subr.bf16.mxu0 0
    %120 = vmatpush1.bf16.msra.mxu0 0
    %121 = vmatprep.subr.bf16.mxu0 0
    %122 = vmatpush1.bf16.msra.mxu0 0
    %123 = vmatprep.subr.bf16.mxu0 0
    %124 = vmatpush1.bf16.msra.mxu0 0
    %125 = vmatprep.subr.bf16.mxu0 0
    %126 = vmatpush1.bf16.msra.mxu0 0
    %127 = vmatprep.subr.bf16.mxu0 0
    %128 = vmatpush1.bf16.msra.mxu0 0
    %129 = vmatprep.subr.bf16.mxu0 0
    %130 = vmatpush1.bf16.msra.mxu0 0
    %131 = vmatprep.mubr.bf16.mxu0 0
    %132 = vmatmul.mubr.bf16.gmra.mrb[0].mxu0 %v85
    %v133 = vpop.f32.mrb[0].mxu0
    %v134 = vadd.f32 0.0, %v133
    %v135 = vpop.f32.mrb[0].mxu0
    %v136 = vpop.f32.mrb[0].mxu0
    %v137 = vadd.f32 0.0, %v136
    %v138 = vpop.f32.mrb[0].mxu0
    %139 = vmatprep.mubr.bf16.mxu0 0
    %140 = vmatmul.mubr.bf16.gmra.mrb[0].mxu0 %v88
    %v141 = vpop.f32.mrb[0].mxu0
    %v142 = vadd.f32 0.0, %v141
    %v143 = vpop.f32.mrb[0].mxu0
    %v144 = vpop.f32.mrb[0].mxu0
    %v145 = vadd.f32 0.0, %v144
    %v146 = vpop.f32.mrb[0].mxu0
    %147 = vmatprep.mubr.bf16.mxu0 0
    %148 = vmatmul.mubr.bf16.gmra.mrb[0].mxu0 %v91
    %v149 = vpop.f32.mrb[0].mxu0
    %v150 = vadd.f32 0.0, %v149
    %v151 = vpop.f32.mrb[0].mxu0
    %v152 = vpop.f32.mrb[0].mxu0
    %v153 = vadd.f32 0.0, %v152
    %v154 = vpop.f32.mrb[0].mxu0
    %155 = vmatprep.mubr.bf16.mxu0 0
    %156 = vmatmul.mubr.bf16.gmra.mrb[0].mxu0 %v94
    %v157 = vpop.f32.mrb[0].mxu0
    %v158 = vadd.f32 0.0, %v157
    %v159 = vpop.f32.mrb[0].mxu0
    %v160 = vpop.f32.mrb[0].mxu0
    %v161 = vadd.f32 0.0, %v160
    %v162 = vpop.f32.mrb[0].mxu0
    %163 = vmatprep.mubr.bf16.mxu0 0
    %164 = vmatmul.mubr.bf16.gmra.mrb[0].mxu0 %v97
    %v165 = vpop.f32.mrb[0].mxu0
    %v166 = vadd.f32 0.0, %v165
    %v167 = vpop.f32.mrb[0].mxu0
    %v168 = vpop.f32.mrb[0].mxu0
    %v169 = vadd.f32 0.0, %v168
    %v170 = vpop.f32.mrb[0].mxu0
    %171 = vdwg.mxu0
    %v172 = vpack.c.bf16 %v137, %v134
    %v173 = vpack.c.bf16 %v145, %v142
    %v174 = vpack.c.bf16 %v153, %v150
    %v175 = vpack.c.bf16 %v161, %v158
    %v176 = vpack.c.bf16 %v169, %v166
    %v177 = vld [vmem:[%s4] sm:$0xf]
    %v178 = vld [vmem:[%s4 + $0x4] sm:$0xf]
    %v179 = vld [vmem:[%s4 + $0x8] sm:$0xf]
    %v180 = vld [vmem:[%s4 + $0xc] sm:$0xf]
    %v181 = vld [vmem:[%s4 + $0x10] sm:$0xf]
    %v182 = vld [vmem:[%s4 + $0x14] sm:$0xf]
    %v183 = vld [vmem:[%s4 + $0x18] sm:$0xf]
    %v184 = vld [vmem:[%s4 + $0x1c] sm:$0xf]
    %v185 = vld [vmem:[%s4 + $0x20] sm:$0xf]
    %v186 = vld [vmem:[%s4 + $0x24] sm:$0xf]
    %v187 = vld [vmem:[%s4 + $0x28] sm:$0xf]
    %v188 = vld [vmem:[%s4 + $0x2c] sm:$0xf]
    %v201 = vunpack.c.l.b16 %v177
    %v202 = vunpack.c.l.b16 %v178
    %v203 = vunpack.c.l.b16 %v179
    %v204 = vunpack.c.l.b16 %v180
    %v205 = vunpack.c.l.b16 %v181
    %v206 = vunpack.c.l.b16 %v182
    %v207 = vunpack.c.l.b16 %v183
    %v208 = vunpack.c.l.b16 %v184
    %v209 = vunpack.c.l.b16 %v185
    %v210 = vunpack.c.l.b16 %v186
    %v211 = vunpack.c.l.b16 %v187
    %v212 = vunpack.c.l.b16 %v188
    %v213 = vpack.c.b16 %v202, %v201
    %v214 = vpack.c.b16 %v204, %v203
    %v215 = vpack.c.b16 %v206, %v205
    %v216 = vpack.c.b16 %v208, %v207
    %v217 = vpack.c.b16 %v210, %v209
    %v218 = vpack.c.b16 %v212, %v211
    %vm225 = vcmask 785408
    %v227 = vsel %vm225, %v172, 0
    %v230 = vsel %vm225, %v173, 0
    %v233 = vsel %vm225, %v174, 0
    %v236 = vsel %vm225, %v175, 0
    %v239 = vsel %vm225, %v176, 0
    %241 = vmatprep.subr.bf16.mxu0 0
    %242 = vmatpush1.bf16.msra.mxu0 %v213
    %243 = vmatprep.subr.bf16.mxu0 0
    %244 = vmatpush1.bf16.msra.mxu0 %v214
    %245 = vmatprep.subr.bf16.mxu0 0
    %246 = vmatpush1.bf16.msra.mxu0 %v215
    %247 = vmatprep.subr.bf16.mxu0 0
    %248 = vmatpush1.bf16.msra.mxu0 %v216
    %249 = vmatprep.subr.bf16.mxu0 0
    %250 = vmatpush1.bf16.msra.mxu0 %v217
    %251 = vmatprep.subr.bf16.mxu0 0
    %252 = vmatpush1.bf16.msra.mxu0 %v218
    %253 = vmatprep.subr.bf16.mxu0 0
    %254 = vmatpush1.bf16.msra.mxu0 0
    %255 = vmatprep.subr.bf16.mxu0 0
    %256 = vmatpush1.bf16.msra.mxu0 0
    %257 = vmatprep.subr.bf16.mxu0 0
    %258 = vmatpush1.bf16.msra.mxu0 0
    %259 = vmatprep.subr.bf16.mxu0 0
    %260 = vmatpush1.bf16.msra.mxu0 0
    %261 = vmatprep.subr.bf16.mxu0 0
    %262 = vmatpush1.bf16.msra.mxu0 0
    %263 = vmatprep.subr.bf16.mxu0 0
    %264 = vmatpush1.bf16.msra.mxu0 0
    %265 = vmatprep.subr.bf16.mxu0 0
    %266 = vmatpush1.bf16.msra.mxu0 0
    %267 = vmatprep.subr.bf16.mxu0 0
    %268 = vmatpush1.bf16.msra.mxu0 0
    %269 = vmatprep.subr.bf16.mxu0 0
    %270 = vmatpush1.bf16.msra.mxu0 0
    %271 = vmatprep.subr.bf16.mxu0 0
    %272 = vmatpush1.bf16.msra.mxu0 0
    %273 = vmatprep.mubr.bf16.mxu0 0
    %274 = vmatmul.mubr.bf16.gmra.mrb[0].mxu0 %v227
    %v275 = vpop.f32.mrb[0].mxu0
    %v276 = vadd.f32 0.0, %v275
    %v277 = vpop.f32.mrb[0].mxu0
    %v278 = vpop.f32.mrb[0].mxu0
    %v279 = vadd.f32 0.0, %v278
    %v280 = vpop.f32.mrb[0].mxu0
    %281 = vmatprep.mubr.bf16.mxu0 0
    %282 = vmatmul.mubr.bf16.gmra.mrb[0].mxu0 %v230
    %v283 = vpop.f32.mrb[0].mxu0
    %v284 = vadd.f32 0.0, %v283
    %v285 = vpop.f32.mrb[0].mxu0
    %v286 = vpop.f32.mrb[0].mxu0
    %v287 = vadd.f32 0.0, %v286
    %v288 = vpop.f32.mrb[0].mxu0
    %289 = vmatprep.mubr.bf16.mxu0 0
    %290 = vmatmul.mubr.bf16.gmra.mrb[0].mxu0 %v233
    %v291 = vpop.f32.mrb[0].mxu0
    %v292 = vadd.f32 0.0, %v291
    %v293 = vpop.f32.mrb[0].mxu0
    %v294 = vpop.f32.mrb[0].mxu0
    %v295 = vadd.f32 0.0, %v294
    %v296 = vpop.f32.mrb[0].mxu0
    %297 = vmatprep.mubr.bf16.mxu0 0
    %298 = vmatmul.mubr.bf16.gmra.mrb[0].mxu0 %v236
    %v299 = vpop.f32.mrb[0].mxu0
    %v300 = vadd.f32 0.0, %v299
    %v301 = vpop.f32.mrb[0].mxu0
    %v302 = vpop.f32.mrb[0].mxu0
    %v303 = vadd.f32 0.0, %v302
    %v304 = vpop.f32.mrb[0].mxu0
    %305 = vmatprep.mubr.bf16.mxu0 0
    %306 = vmatmul.mubr.bf16.gmra.mrb[0].mxu0 %v239
    %v307 = vpop.f32.mrb[0].mxu0
    %v308 = vadd.f32 0.0, %v307
    %v309 = vpop.f32.mrb[0].mxu0
    %v310 = vpop.f32.mrb[0].mxu0
    %v311 = vadd.f32 0.0, %v310
    %v312 = vpop.f32.mrb[0].mxu0
    %313 = vdwg.mxu0
    %v314 = vmul.f32 %v276, %v276
    %v315 = vmul.f32 %v279, %v279
    %v316 = vmul.f32 %v284, %v284
    %v317 = vmul.f32 %v287, %v287
    %v318 = vmul.f32 %v276, %v284
    %v319 = vmul.f32 %v279, %v287
    %v320 = vsub.f32 %v292, %v314
    %v321 = vsub.f32 %v295, %v315
    %v322 = vsub.f32 %v300, %v316
    %v323 = vsub.f32 %v303, %v317
    %v324 = vsub.f32 %v308, %v318
    %v325 = vsub.f32 %v311, %v319
    %v326 = vmul.f32 %v318, 2.0
    %v327 = vmul.f32 %v319, 2.0
    %v328 = vadd.f32 %v326, 0.0001
    %v329 = vadd.f32 %v327, 0.0001
    %v330 = vmul.f32 %v324, 2.0
    %v331 = vmul.f32 %v325, 2.0
    %v332 = vadd.f32 %v330, 0.0009
    %v333 = vadd.f32 %v331, 0.0009
    %v334 = vmul.f32 %v328, %v332
    %v335 = vmul.f32 %v329, %v333
    %v336 = vadd.f32 %v314, %v316
    %v337 = vadd.f32 %v315, %v317
    %v338 = vadd.f32 %v336, 0.0001
    %v339 = vadd.f32 %v337, 0.0001
    %v340 = vadd.f32 %v320, %v322
    %v341 = vadd.f32 %v321, %v323
    %v342 = vadd.f32 %v340, 0.0009
    %v343 = vadd.f32 %v341, 0.0009
    %v344 = vmul.f32 %v338, %v342
    %v345 = vmul.f32 %v339, %v343
    %v346 = vrcp.pop %v344
    %v347 = vrcp.pop %v345
    %v348 = vmul.f32 %v334, %v346
    %v349 = vmul.f32 %v335, %v347
    %v350 = vsel %vm225, %v348, 0.0
    %351 = vadd.xlane.f32.xlu0 %v350
    %v352 = vpop.xlane.xlu0 %351
    %v353 = vsel %vm225, %v349, 0.0
    %354 = vadd.xlane.f32.xlu0 %v353
    %v355 = vpop.xlane.xlu0 %354
    %v356 = vadd.f32 %v352, %v355
    %v357 = vrot.slane %v356, 4
    %v358 = vadd.f32 %v356, %v357
    %v359 = vrot.slane %v358, 2
    %v360 = vadd.f32 %v358, %v359
    %v361 = vrot.slane %v360, 1
    %v362 = vadd.f32 %v360, %v361
    %v363 = vsub.f32 %v31, %v33
    %v364 = vsub.f32 %v32, %v34
    %v365 = vand.u32 2147483647, %v363
    %v366 = vand.u32 2147483647, %v364
    %v367 = vsel %vm225, %v365, 0.0
    %368 = vadd.xlane.f32.xlu0 %v367
    %v369 = vpop.xlane.xlu0 %368
    %v370 = vsel %vm225, %v366, 0.0
    %371 = vadd.xlane.f32.xlu0 %v370
    %v372 = vpop.xlane.xlu0 %371
    %v373 = vadd.f32 %v369, %v372
    %v374 = vrot.slane %v373, 4
    %v375 = vadd.f32 %v373, %v374
    %v376 = vrot.slane %v375, 2
    %v377 = vadd.f32 %v375, %v376
    %v378 = vrot.slane %v377, 1
    %v379 = vadd.f32 %v377, %v378
    %v380 = vsub.f32 %v31, %v35
    %v381 = vsub.f32 %v32, %v36
    %v382 = vand.u32 2147483647, %v380
    %v383 = vand.u32 2147483647, %v381
    %v384 = vsel %vm225, %v382, 0.0
    %385 = vadd.xlane.f32.xlu0 %v384
    %v386 = vpop.xlane.xlu0 %385
    %v387 = vsel %vm225, %v383, 0.0
    %388 = vadd.xlane.f32.xlu0 %v387
    %v389 = vpop.xlane.xlu0 %388
    %v390 = vadd.f32 %v386, %v389
    %v391 = vrot.slane %v390, 4
    %v392 = vadd.f32 %v390, %v391
    %v393 = vrot.slane %v392, 2
    %v394 = vadd.f32 %v392, %v393
    %v395 = vrot.slane %v394, 1
    %v396 = vadd.f32 %v394, %v395
    %v397 = vpack.c.bf16 %v364, %v363
    %v398 = vld [vmem:[%s5] sm:$0xf]
    %v399 = vld [vmem:[%s5 + $0x4] sm:$0xf]
    %v400 = vld [vmem:[%s5 + $0x8] sm:$0xf]
    %v401 = vld [vmem:[%s5 + $0xc] sm:$0x3]
    %v406 = vunpack.c.l.b16 %v398
    %v407 = vunpack.c.l.b16 %v399
    %v408 = vunpack.c.l.b16 %v400
    %v409 = vunpack.c.l.b16 %v401
    %v410 = vpack.c.b16 %v407, %v406
    %v411 = vpack.c.b16 %v409, %v408
    %vm412 = vcmask 130048
    %v414 = vsel %vm412, %v410, 0
    %v417 = vsel %vm412, %v411, 0
    %419 = vmatprep.subr.bf16.mxu0 0
    %420 = vmatpush1.bf16.msra.mxu0 %v397
    %421 = vmatprep.subr.bf16.mxu0 0
    %422 = vmatpush1.bf16.msra.mxu0 0
    %423 = vmatprep.subr.bf16.mxu0 0
    %424 = vmatpush1.bf16.msra.mxu0 0
    %425 = vmatprep.subr.bf16.mxu0 0
    %426 = vmatpush1.bf16.msra.mxu0 0
    %427 = vmatprep.subr.bf16.mxu0 0
    %428 = vmatpush1.bf16.msra.mxu0 0
    %429 = vmatprep.subr.bf16.mxu0 0
    %430 = vmatpush1.bf16.msra.mxu0 0
    %431 = vmatprep.subr.bf16.mxu0 0
    %432 = vmatpush1.bf16.msra.mxu0 0
    %433 = vmatprep.subr.bf16.mxu0 0
    %434 = vmatpush1.bf16.msra.mxu0 0
    %435 = vmatprep.subr.bf16.mxu0 0
    %436 = vmatpush1.bf16.msra.mxu0 0
    %437 = vmatprep.subr.bf16.mxu0 0
    %438 = vmatpush1.bf16.msra.mxu0 0
    %439 = vmatprep.subr.bf16.mxu0 0
    %440 = vmatpush1.bf16.msra.mxu0 0
    %441 = vmatprep.subr.bf16.mxu0 0
    %442 = vmatpush1.bf16.msra.mxu0 0
    %443 = vmatprep.subr.bf16.mxu0 0
    %444 = vmatpush1.bf16.msra.mxu0 0
    %445 = vmatprep.subr.bf16.mxu0 0
    %446 = vmatpush1.bf16.msra.mxu0 0
    %447 = vmatprep.subr.bf16.mxu0 0
    %448 = vmatpush1.bf16.msra.mxu0 0
    %449 = vmatprep.subr.bf16.mxu0 0
    %450 = vmatpush1.bf16.msra.mxu0 0
    %451 = vmatprep.mubr.bf16.mxu0 0
    %452 = vmatmul.mubr.bf16.gmra.mrb[0].mxu0 %v414
    %v453 = vpop.f32.mrb[0].mxu0
    %v454 = vadd.f32 0.0, %v453
    %v455 = vpop.f32.mrb[0].mxu0
    %v456 = vpop.f32.mrb[0].mxu0
    %v457 = vadd.f32 0.0, %v456
    %v458 = vpop.f32.mrb[0].mxu0
    %459 = vmatprep.mubr.bf16.mxu0 0
    %460 = vmatmul.mubr.bf16.gmra.mrb[0].mxu0 %v417
    %v461 = vpop.f32.mrb[0].mxu0
    %v462 = vadd.f32 0.0, %v461
    %v463 = vpop.f32.mrb[0].mxu0
    %v464 = vpop.f32.mrb[0].mxu0
    %v465 = vadd.f32 0.0, %v464
    %v466 = vpop.f32.mrb[0].mxu0
    %467 = vdwg.mxu0
    %v468 = vpack.c.bf16 %v457, %v454
    %v469 = vpack.c.bf16 %v465, %v462
    %v470 = vld [vmem:[%s6] sm:$0xff]
    %v471 = vld [vmem:[%s6 + $0x8] sm:$0xff]
    %v472 = vld [vmem:[%s6 + $0x10] sm:$0xff]
    %v473 = vld [vmem:[%s6 + $0x18] sm:$0xff]
    %v474 = vld [vmem:[%s6 + $0x20] sm:$0xff]
    %v475 = vld [vmem:[%s6 + $0x28] sm:$0xff]
    %v476 = vld [vmem:[%s6 + $0x30] sm:$0xff]
    %v477 = vld [vmem:[%s6 + $0x38] sm:$0xff]
    %v478 = vld [vmem:[%s6 + $0x40] sm:$0xff]
    %v479 = vld [vmem:[%s6 + $0x48] sm:$0xff]
    %v480 = vld [vmem:[%s6 + $0x50] sm:$0xff]
    %v481 = vld [vmem:[%s6 + $0x58] sm:$0xff]
    %v494 = vunpack.c.l.b16 %v470
    %v495 = vunpack.c.h.b16 %v470
    %v496 = vunpack.c.l.b16 %v471
    %v497 = vunpack.c.h.b16 %v471
    %v498 = vunpack.c.l.b16 %v472
    %v499 = vunpack.c.h.b16 %v472
    %v500 = vunpack.c.l.b16 %v473
    %v501 = vunpack.c.h.b16 %v473
    %v502 = vunpack.c.l.b16 %v474
    %v503 = vunpack.c.h.b16 %v474
    %v504 = vunpack.c.l.b16 %v475
    %v505 = vunpack.c.h.b16 %v475
    %v506 = vunpack.c.l.b16 %v476
    %v507 = vunpack.c.h.b16 %v476
    %v508 = vunpack.c.l.b16 %v477
    %v509 = vunpack.c.h.b16 %v477
    %v510 = vunpack.c.l.b16 %v478
    %v511 = vunpack.c.h.b16 %v478
    %v512 = vunpack.c.l.b16 %v479
    %v513 = vunpack.c.h.b16 %v479
    %v514 = vunpack.c.l.b16 %v480
    %v515 = vunpack.c.h.b16 %v480
    %v516 = vunpack.c.l.b16 %v481
    %v517 = vunpack.c.h.b16 %v481
    %v518 = vpack.c.b16 %v496, %v494
    %v519 = vpack.c.b16 %v497, %v495
    %v520 = vpack.c.b16 %v500, %v498
    %v521 = vpack.c.b16 %v501, %v499
    %v522 = vpack.c.b16 %v504, %v502
    %v523 = vpack.c.b16 %v505, %v503
    %v524 = vpack.c.b16 %v508, %v506
    %v525 = vpack.c.b16 %v509, %v507
    %v526 = vpack.c.b16 %v512, %v510
    %v527 = vpack.c.b16 %v513, %v511
    %v528 = vpack.c.b16 %v516, %v514
    %v529 = vpack.c.b16 %v517, %v515
    %v543 = vsel %vm225, %v468, 0
    %v546 = vsel %vm225, %v469, 0
    %548 = vmatprep.subr.bf16.mxu0 %v519
    %549 = vmatpush1.bf16.msra.mxu0 %v518
    %550 = vmatprep.subr.bf16.mxu0 %v521
    %551 = vmatpush1.bf16.msra.mxu0 %v520
    %552 = vmatprep.subr.bf16.mxu0 %v523
    %553 = vmatpush1.bf16.msra.mxu0 %v522
    %554 = vmatprep.subr.bf16.mxu0 %v525
    %555 = vmatpush1.bf16.msra.mxu0 %v524
    %556 = vmatprep.subr.bf16.mxu0 %v527
    %557 = vmatpush1.bf16.msra.mxu0 %v526
    %558 = vmatprep.subr.bf16.mxu0 %v529
    %559 = vmatpush1.bf16.msra.mxu0 %v528
    %560 = vmatprep.subr.bf16.mxu0 0
    %561 = vmatpush1.bf16.msra.mxu0 0
    %562 = vmatprep.subr.bf16.mxu0 0
    %563 = vmatpush1.bf16.msra.mxu0 0
    %564 = vmatprep.subr.bf16.mxu0 0
    %565 = vmatpush1.bf16.msra.mxu0 0
    %566 = vmatprep.subr.bf16.mxu0 0
    %567 = vmatpush1.bf16.msra.mxu0 0
    %568 = vmatprep.subr.bf16.mxu0 0
    %569 = vmatpush1.bf16.msra.mxu0 0
    %570 = vmatprep.subr.bf16.mxu0 0
    %571 = vmatpush1.bf16.msra.mxu0 0
    %572 = vmatprep.subr.bf16.mxu0 0
    %573 = vmatpush1.bf16.msra.mxu0 0
    %574 = vmatprep.subr.bf16.mxu0 0
    %575 = vmatpush1.bf16.msra.mxu0 0
    %576 = vmatprep.subr.bf16.mxu0 0
    %577 = vmatpush1.bf16.msra.mxu0 0
    %578 = vmatprep.subr.bf16.mxu0 0
    %579 = vmatpush1.bf16.msra.mxu0 0
    %580 = vmatprep.mubr.bf16.mxu0 0
    %581 = vmatmul.mubr.bf16.gmra.mrb[0].mxu0 %v543
    %v582 = vpop.f32.mrb[0].mxu0
    %v583 = vadd.f32 0.0, %v582
    %v584 = vpop.f32.mrb[0].mxu0
    %v585 = vadd.f32 0.0, %v584
    %v586 = vpop.f32.mrb[0].mxu0
    %v587 = vadd.f32 0.0, %v586
    %v588 = vpop.f32.mrb[0].mxu0
    %v589 = vadd.f32 0.0, %v588
    %590 = vmatprep.mubr.bf16.mxu0 0
    %591 = vmatmul.mubr.bf16.gmra.mrb[0].mxu0 %v546
    %v592 = vpop.f32.mrb[0].mxu0
    %v593 = vadd.f32 0.0, %v592
    %v594 = vpop.f32.mrb[0].mxu0
    %v595 = vadd.f32 0.0, %v594
    %v596 = vpop.f32.mrb[0].mxu0
    %v597 = vadd.f32 0.0, %v596
    %v598 = vpop.f32.mrb[0].mxu0
    %v599 = vadd.f32 0.0, %v598
    %600 = vdwg.mxu0
    %v601 = vand.u32 2147483647, %v583
    %v602 = vand.u32 2147483647, %v585
    %v603 = vand.u32 2147483647, %v587
    %v604 = vand.u32 2147483647, %v589
    %v605 = vand.u32 2147483647, %v593
    %v606 = vand.u32 2147483647, %v595
    %v607 = vand.u32 2147483647, %v597
    %v608 = vand.u32 2147483647, %v599
    %v609 = vlaneseq
    %v610 = vshrl.u32 %v609, 7
    %v611 = vadd.s32 %v610, 8
    %v612 = vadd.s32 %v610, 16
    %v613 = vadd.s32 %v610, 24
    %vm614 = vcmp.lt.s32.totalorder %v610, 14
    %vm615 = vcmp.lt.s32.totalorder %v611, 14
    %vm616 = vcmp.lt.s32.totalorder %v612, 14
    %vm617 = vcmp.lt.s32.totalorder %v613, 14
    %v618 = vlaneseq
    %v619 = vand.u32 %v618, 127
    %v620 = vadd.s32 %v619, 128
    %vm621 = vcmp.lt.s32.totalorder %v619, 84
    %vm622 = vcmp.lt.s32.totalorder %v620, 84
    %vm623 = vmand %vm614, %vm621
    %vm624 = vmand %vm614, %vm622
    %vm625 = vmand %vm615, %vm621
    %vm626 = vmand %vm615, %vm622
    %vm627 = vmand %vm616, %vm621
    %vm628 = vmand %vm616, %vm622
    %vm629 = vmand %vm617, %vm621
    %vm630 = vmand %vm617, %vm622
    %v631 = vsel %vm623, %v601, 0.0
    %v632 = vsel %vm624, %v602, 0.0
    %v633 = vsel %vm625, %v603, 0.0
    %v634 = vsel %vm626, %v604, 0.0
    %v635 = vsel %vm627, %v605, 0.0
    %v636 = vsel %vm628, %v606, 0.0
    %v637 = vsel %vm629, %v607, 0.0
    %v638 = vsel %vm630, %v608, 0.0
    %vm639 = vcmask 326656
    %v640 = vsel %vm639, %v632, 0.0
    %v641 = vadd.f32 %v631, %v640
    %642 = vadd.xlane.f32.xlu0 %v641
    %v643 = vpop.xlane.xlu0 %642
    %v644 = vsel %vm639, %v634, 0.0
    %v645 = vadd.f32 %v633, %v644
    %646 = vadd.xlane.f32.xlu0 %v645
    %v647 = vpop.xlane.xlu0 %646
    %v648 = vsel %vm639, %v636, 0.0
    %v649 = vadd.f32 %v635, %v648
    %650 = vadd.xlane.f32.xlu0 %v649
    %v651 = vpop.xlane.xlu0 %650
    %vm652 = vcmask 1043456
    %v653 = vsel %vm652, %v637, 0.0
    %vm654 = vcmask 322560
    %v655 = vsel %vm654, %v638, 0.0
    %v656 = vadd.f32 %v653, %v655
    %657 = vadd.xlane.f32.xlu0 %v656
    %v658 = vpop.xlane.xlu0 %657
    %v659 = vadd.f32 %v643, %v647
    %v660 = vadd.f32 %v659, %v651
    %v661 = vsel %vm652, %v658, 0.0
    %v662 = vadd.f32 %v660, %v661
    %v663 = vrot.slane %v662, 4
    %v664 = vadd.f32 %v662, %v663
    %v665 = vrot.slane %v664, 2
    %v666 = vadd.f32 %v664, %v665
    %v667 = vrot.slane %v666, 1
    %v668 = vadd.f32 %v666, %v667
    %vm669 = vmxor %vm614, 1
    %vm670 = vmxor %vm615, 1
    %vm671 = vmxor %vm616, 1
    %vm672 = vmxor %vm617, 1
    %vm673 = vmxor %vm621, 1
    %vm674 = vmxor %vm622, 1
    %vm675 = vmand %vm669, %vm673
    %vm676 = vmand %vm669, %vm674
    %vm677 = vmand %vm670, %vm673
    %vm678 = vmand %vm670, %vm674
    %vm679 = vmand %vm671, %vm673
    %vm680 = vmand %vm671, %vm674
    %vm681 = vmand %vm672, %vm673
    %vm682 = vmand %vm672, %vm674
    %v683 = vsel %vm675, %v601, 0.0
    %v684 = vsel %vm676, %v602, 0.0
    %v685 = vsel %vm677, %v603, 0.0
    %v686 = vsel %vm678, %v604, 0.0
    %v687 = vsel %vm679, %v605, 0.0
    %v688 = vsel %vm680, %v606, 0.0
    %v689 = vsel %vm681, %v607, 0.0
    %v690 = vsel %vm682, %v608, 0.0
    %v691 = vsel %vm639, %v684, 0.0
    %v692 = vadd.f32 %v683, %v691
    %693 = vadd.xlane.f32.xlu0 %v692
    %v694 = vpop.xlane.xlu0 %693
    %v695 = vsel %vm639, %v686, 0.0
    %v696 = vadd.f32 %v685, %v695
    %697 = vadd.xlane.f32.xlu0 %v696
    %v698 = vpop.xlane.xlu0 %697
    %v699 = vsel %vm639, %v688, 0.0
    %v700 = vadd.f32 %v687, %v699
    %701 = vadd.xlane.f32.xlu0 %v700
    %v702 = vpop.xlane.xlu0 %701
    %v703 = vsel %vm652, %v689, 0.0
    %v704 = vsel %vm654, %v690, 0.0
    %v705 = vadd.f32 %v703, %v704
    %706 = vadd.xlane.f32.xlu0 %v705
    %v707 = vpop.xlane.xlu0 %706
    %v708 = vadd.f32 %v694, %v698
    %v709 = vadd.f32 %v708, %v702
    %v710 = vsel %vm652, %v707, 0.0
    %v711 = vadd.f32 %v709, %v710
    %v712 = vrot.slane %v711, 4
    %v713 = vadd.f32 %v711, %v712
    %v714 = vrot.slane %v713, 2
    %v715 = vadd.f32 %v713, %v714
    %v716 = vrot.slane %v715, 1
    %v717 = vadd.f32 %v715, %v716
    %v718 = vld [vmem:[%s7] sm:$0xf]
    %v719 = vld [vmem:[%s7 + $0x4] sm:$0xf]
    %v720 = vld [vmem:[%s7 + $0x8] sm:$0xf]
    %v721 = vld [vmem:[%s7 + $0xc] sm:$0xf]
    %v722 = vld [vmem:[%s7 + $0x10] sm:$0xf]
    %v723 = vld [vmem:[%s7 + $0x14] sm:$0xf]
    %v724 = vld [vmem:[%s7 + $0x18] sm:$0xf]
    %v725 = vld [vmem:[%s7 + $0x1c] sm:$0xf]
    %v726 = vld [vmem:[%s7 + $0x20] sm:$0xf]
    %v727 = vld [vmem:[%s7 + $0x24] sm:$0xf]
    %v728 = vld [vmem:[%s7 + $0x28] sm:$0xf]
    %v729 = vld [vmem:[%s7 + $0x2c] sm:$0xf]
    %v742 = vunpack.c.l.b16 %v718
    %v743 = vunpack.c.l.b16 %v719
    %v744 = vunpack.c.l.b16 %v720
    %v745 = vunpack.c.l.b16 %v721
    %v746 = vunpack.c.l.b16 %v722
    %v747 = vunpack.c.l.b16 %v723
    %v748 = vunpack.c.l.b16 %v724
    %v749 = vunpack.c.l.b16 %v725
    %v750 = vunpack.c.l.b16 %v726
    %v751 = vunpack.c.l.b16 %v727
    %v752 = vunpack.c.l.b16 %v728
    %v753 = vunpack.c.l.b16 %v729
    %v754 = vpack.c.b16 %v743, %v742
    %v755 = vpack.c.b16 %v745, %v744
    %v756 = vpack.c.b16 %v747, %v746
    %v757 = vpack.c.b16 %v749, %v748
    %v758 = vpack.c.b16 %v751, %v750
    %v759 = vpack.c.b16 %v753, %v752
    %v767 = vsel %vm225, %v397, 0
    %769 = vmatprep.subr.bf16.mxu0 0
    %770 = vmatpush1.bf16.msra.mxu0 %v754
    %771 = vmatprep.subr.bf16.mxu0 0
    %772 = vmatpush1.bf16.msra.mxu0 %v755
    %773 = vmatprep.subr.bf16.mxu0 0
    %774 = vmatpush1.bf16.msra.mxu0 %v756
    %775 = vmatprep.subr.bf16.mxu0 0
    %776 = vmatpush1.bf16.msra.mxu0 %v757
    %777 = vmatprep.subr.bf16.mxu0 0
    %778 = vmatpush1.bf16.msra.mxu0 %v758
    %779 = vmatprep.subr.bf16.mxu0 0
    %780 = vmatpush1.bf16.msra.mxu0 %v759
    %781 = vmatprep.subr.bf16.mxu0 0
    %782 = vmatpush1.bf16.msra.mxu0 0
    %783 = vmatprep.subr.bf16.mxu0 0
    %784 = vmatpush1.bf16.msra.mxu0 0
    %785 = vmatprep.subr.bf16.mxu0 0
    %786 = vmatpush1.bf16.msra.mxu0 0
    %787 = vmatprep.subr.bf16.mxu0 0
    %788 = vmatpush1.bf16.msra.mxu0 0
    %789 = vmatprep.subr.bf16.mxu0 0
    %790 = vmatpush1.bf16.msra.mxu0 0
    %791 = vmatprep.subr.bf16.mxu0 0
    %792 = vmatpush1.bf16.msra.mxu0 0
    %793 = vmatprep.subr.bf16.mxu0 0
    %794 = vmatpush1.bf16.msra.mxu0 0
    %795 = vmatprep.subr.bf16.mxu0 0
    %796 = vmatpush1.bf16.msra.mxu0 0
    %797 = vmatprep.subr.bf16.mxu0 0
    %798 = vmatpush1.bf16.msra.mxu0 0
    %799 = vmatprep.subr.bf16.mxu0 0
    %800 = vmatpush1.bf16.msra.mxu0 0
    %801 = vmatprep.mubr.bf16.mxu0 0
    %802 = vmatmul.mubr.bf16.gmra.mrb[0].mxu0 %v767
    %v803 = vpop.f32.mrb[0].mxu0
    %v804 = vadd.f32 0.0, %v803
    %v805 = vpop.f32.mrb[0].mxu0
    %v806 = vpop.f32.mrb[0].mxu0
    %v807 = vadd.f32 0.0, %v806
    %v808 = vpop.f32.mrb[0].mxu0
    %809 = vdwg.mxu0
    %vm810 = vcmask 48128
    %v811 = vsel %vm810, %v804, 0.0
    %v812 = vsel %vm810, %v807, 0.0
    %v813 = vadd.f32 %v811, %v812
    %v814 = vrot.slane %v813, 4
    %v815 = vadd.f32 %v813, %v814
    %v816 = vrot.slane %v815, 2
    %v817 = vadd.f32 %v815, %v816
    %v818 = vrot.slane %v817, 1
    %v819 = vadd.f32 %v817, %v818
    %v820 = vmul.f32 %v819, %v819
    %v821 = vsel %vm810, %v820, 0.0
    %822 = vadd.xlane.f32.xlu0 %v821
    %v823 = vpop.xlane.xlu0 %822
    %v824 = vmul.f32 %v823, 1.5258789e-05
    %vm825 = vcmp.eq.s32.totalorder %v619, 0
    %v826 = vsel %vm825, %v362, 0.0
    %v827 = vadd.f32 %v826, 0.0
    %vm828 = vcmp.eq.s32.totalorder %v619, 1
    %v829 = vsel %vm828, %v379, 0.0
    %v830 = vadd.f32 %v827, %v829
    %vm831 = vcmp.eq.s32.totalorder %v619, 2
    %v832 = vsel %vm831, %v396, 0.0
    %v833 = vadd.f32 %v830, %v832
    %vm834 = vcmp.eq.s32.totalorder %v619, 3
    %v835 = vsel %vm834, %v668, 0.0
    %v836 = vadd.f32 %v833, %v835
    %vm837 = vcmp.eq.s32.totalorder %v619, 4
    %v838 = vsel %vm837, %v717, 0.0
    %v839 = vadd.f32 %v836, %v838
    %vm840 = vcmp.eq.s32.totalorder %v619, 5
    %v841 = vsel %vm840, %v824, 0.0
    %v842 = vadd.f32 %v839, %v841
    %p843 = scmp.eq.s32.totalorder 0, 0
    // Predicated region
    $region34: #{tpu_custom_call.1} parent=1 // pred_check
      %p844 = pneg %p843
    $region35: #{tpu_custom_call.1} parent=1 // pred_check_branch
      %846 = sbr.rel (%p844) target = $region37
    $region36: #{tpu_custom_call.1} parent=1 // pred_region
      %vm847 = vcmask 57344
      %848 = vst.msk [vmem:[#allocation2] sm:$0x1] %vm847, 0.0
    $region37: #{tpu_custom_call.1} parent=1 // pred_fallthru
      _
    %v849 = vld [vmem:[#allocation2] sm:$0x1]
    %v850 = vadd.f32 %v849, %v842
    %vm851 = vcmask 57344
    %852 = vst.msk [vmem:[#allocation2] sm:$0x1] %vm851, %v850
    // Predicated region
    $region38: #{tpu_custom_call.1} parent=1 // pred_check
      _
    $region39: #{tpu_custom_call.1} parent=1 // pred_check_branch
      %854 = sbr.rel (0) target = $region41
    $region40: #{tpu_custom_call.1} parent=1 // pred_region
      %s856 = ssub.s32 16, 16
      %857 = vsyncadd [#allocation3], %s856
      %s859 = sshll.u32 [#allocation2], 4
      %s860 = int_to_ptr.vmem [resolvable:$true] %s859
      %862 = dma.vmem_to_hbm [thread:$0]  %s860, 16, %s8, [#allocation3]
    $region41: #{tpu_custom_call.1} parent=1 // pred_fallthru
      _
    // Predicated region
    $region42: #{tpu_custom_call.1} parent=1 // pred_check
      _
    $region43: #{tpu_custom_call.1} parent=1 // pred_check_branch
      %864 = sbr.rel (0) target = $region45
    $region44: #{tpu_custom_call.1} parent=1 // pred_region
      %865 = dma.done [#allocation3], 16
    $region45: #{tpu_custom_call.1} parent=1 // pred_fallthru
      _
    %866 = vsyncpa [#allocation3], 1

</llo_original>
